<compile_context>
chip_gen: v6e
topology: v6e:2x2x1
jax: 0.10.0
libtpu: 0.0.40
codegen_flags: <defaults>
</compile_context>

<pallas_src>
import functools

import jax
import jax.numpy as jnp
from jax.experimental import pallas as pl
from jax.experimental.pallas import tpu as pltpu

_LANE = 128
_SUBLANE = 8
_H1 = 128   # fc1 output features
_H2 = 64    # fc2 output features


# ---------------------------------------------------------------------------
# Kernels
# ---------------------------------------------------------------------------
def _head(h1, w2_ref, b2_ref, w3r_ref, b3_ref, o_ref):
    """fc2 + ReLU (MXU) -> fc3 + bias (VPU multiply + lane reduce) -> sigmoid."""
    h2 = jnp.dot(h1, w2_ref[...], preferred_element_type=jnp.float32) + b2_ref[...]
    h2 = jnp.maximum(h2, 0.0)
    # fc3 has a single output column; an MXU pass would waste 127/128 of the
    # array, so do it as an elementwise multiply + lane reduction instead.
    z = jnp.sum(h2 * w3r_ref[...], axis=-1, keepdims=True) + b3_ref[0]
    # TODO(synk): a lane-dense (tb//128,128) output slab would remove masked
    # vst.msk stores, but the (tb,1)->(tb//128,128) relayout may not lower;
    # keep the (tb,1) column output (tiny vs. the x stream).
    o_ref[...] = jax.nn.sigmoid(z).astype(o_ref.dtype)


def _mlp_kernel(x_ref, w1_ref, b1_ref, w2_ref, b2_ref, w3r_ref, b3_ref, o_ref):
    """Fully fused path: entire reduction dim (input_size) in one block."""
    h1 = jnp.dot(x_ref[...], w1_ref[...],
                 preferred_element_type=jnp.float32) + b1_ref[...]
    h1 = jnp.maximum(h1, 0.0)
    _head(h1, w2_ref, b2_ref, w3r_ref, b3_ref, o_ref)


def _mlp_kernel_ktiled(x_ref, w1_ref, b1_ref, w2_ref, b2_ref, w3r_ref, b3_ref,
                       o_ref, h1_acc):
    """K-tiled path for large input_size: accumulate fc1 over the K grid axis,
    finalize (bias+ReLU, fc2, fc3, sigmoid) on the last K step."""
    k = pl.program_id(1)

    @pl.when(k == 0)
    def _init():
        h1_acc[...] = jnp.zeros_like(h1_acc)

    h1_acc[...] += jnp.dot(x_ref[...], w1_ref[...],
                           preferred_element_type=jnp.float32)

    @pl.when(k == pl.num_programs(1) - 1)
    def _finalize():
        h1 = jnp.maximum(h1_acc[...] + b1_ref[...], 0.0)
        _head(h1, w2_ref, b2_ref, w3r_ref, b3_ref, o_ref)


# ---------------------------------------------------------------------------
# Tile selection (generation-aware VMEM budgeting)
# ---------------------------------------------------------------------------
def _vmem_capacity_bytes():
    """Per-core VMEM capacity; conservative v7x fallback if the query fails."""
    try:
        cap = getattr(pltpu.get_tpu_info(), "vmem_capacity_bytes", None)
        if cap:
            return int(cap)
    except Exception:
        pass
    return 64 * 1024 * 1024


def _choose_k_tile(D, block_k):
    """Reduction (input_size) tile.  Must divide D exactly (so no garbage rows
    ever enter the fc1 accumulation) and be a lane multiple; otherwise fall
    back to the full reduction in one block."""
    if block_k is not None:
        tk = int(block_k)
        if tk < D and D % tk == 0 and tk % _LANE == 0:
            return tk
        return D
    if D <= 2048:
        return D
    for tk in range(2048, 0, -_LANE):
        if D % tk == 0:
            return tk
    return D


def _choose_batch_tile(B, tk, nk, block_b, vmem_limit):
    # Fixed (batch-independent) f32 VMEM footprint, (8,128)-padded:
    #   w1 (resident when nk==1, else a double-buffered (tk,128) stream),
    #   b1, w2, b2, w3_row.
    w1_elems = (tk * _H1) if nk == 1 else (2 * tk * _H1)
    fixed = 4 * (w1_elems + _SUBLANE * _LANE + _H1 * _LANE + 2 * _SUBLANE * _LANE)
    budget = vmem_limit - fixed - 4 * 1024 * 1024          # compiler headroom
    # Per-row cost: double-buffered x tile, fc1 accumulator / ReLU result,
    # fc2 intermediates, and the lane-padded double-buffered (tb,1) out block.
    bytes_per_row = 4 * (2 * tk + _H1 + _H1 + 2 * _LANE)
    vmem_rows = max(_SUBLANE, budget // bytes_per_row)

    if block_b is None:
        # Target >= ~4 MiB of x per grid step (HBM roofline), clamp 1024..8192.
        tb = min(max(1024, (4 * 1024 * 1024) // (4 * tk)), 8192)
    else:
        tb = max(1, int(block_b))
    tb = min(tb, vmem_rows)

    if tb >= B:
        return B                                     # full-extent block
    if tb >= _LANE:
        return (tb // _LANE) * _LANE                 # keep MXU M-groups whole
    return max(_SUBLANE, (tb // _SUBLANE) * _SUBLANE)


# ---------------------------------------------------------------------------
# Wrapper
# ---------------------------------------------------------------------------
@functools.partial(jax.jit, static_argnames=("block_b", "block_k"))
def multilayer_nn_forward(x, w1, b1, w2, b2, w3, b3, *, block_b=None, block_k=None):
    """Fused MLP forward.

    Args:
      x:  (B, input_size) float32
      w1: (input_size, 128), b1: (1, 128)
      w2: (128, 64),         b2: (1, 64)
      w3: (64, 1),           b3: (1, 1)
    Returns:
      (B, 1) float32 sigmoid outputs.
    """
    B, D = x.shape
    assert w1.shape == (D, _H1) and w2.shape == (_H1, _H2) and w3.shape == (_H2, 1)

    vmem_cap = _vmem_capacity_bytes()
    # ~75% of physical VMEM: 48 MiB on v7x (64 MiB/TC), 96 MiB on v5e/v6e.
    vmem_limit = int(min(vmem_cap * 3 // 4, 96 * 1024 * 1024))

    tk = _choose_k_tile(D, block_k)
    nk = D // tk
    tb = _choose_batch_tile(B, tk, nk, block_b, vmem_limit)
    nb = pl.cdiv(B, tb)

    w3_row = w3.reshape(1, _H2)     # (1, 64): VPU multiply + lane-reduce in kernel
    b3_s = b3.reshape(-1)           # scalar bias -> SMEM

    cost = pl.CostEstimate(
        flops=2 * B * (D * _H1 + _H1 * _H2 + _H2),
        transcendentals=B,
        bytes_accessed=4 * (B * D + B + D * _H1 + _H1 + _H1 * _H2 + _H2 + _H2 + 1),
    )

    # Resident (single VMEM copy, not pipelined) operands.
    vmem_resident = pl.BlockSpec(memory_space=pltpu.MemorySpace.VMEM)
    smem_scalar = pl.BlockSpec(memory_space=pltpu.MemorySpace.SMEM)

    if nk == 1:
        kernel = _mlp_kernel
        grid = (nb,)
        in_specs = [
            pl.BlockSpec((tb, D), lambda i: (i, 0)),   # x: streamed over batch
            vmem_resident,                             # w1 (whole, single copy)
            vmem_resident,                             # b1
            vmem_resident,                             # w2
            vmem_resident,                             # b2
            vmem_resident,                             # w3_row
            smem_scalar,                               # b3
        ]
        out_specs = pl.BlockSpec((tb, 1), lambda i: (i, 0))
        scratch_shapes = []
        dim_sem = ("parallel",)                        # batch axis -> cores on v7x
    else:
        kernel = _mlp_kernel_ktiled
        grid = (nb, nk)                                # reduction axis last
        in_specs = [
            pl.BlockSpec((tb, tk), lambda i, k: (i, k)),    # x tile (batch, K)
            pl.BlockSpec((tk, _H1), lambda i, k: (k, 0)),   # w1 streamed over K
            vmem_resident,                                  # b1
            vmem_resident,                                  # w2
            vmem_resident,                                  # b2
            vmem_resident,                                  # w3_row
            smem_scalar,                                    # b3
        ]
        out_specs = pl.BlockSpec((tb, 1), lambda i, k: (i, 0))
        scratch_shapes = [pltpu.VMEM((tb, _H1), jnp.float32)]  # fc1 accumulator
        dim_sem = ("parallel", "arbitrary")

    return pl.pallas_call(
        kernel,
        out_shape=jax.ShapeDtypeStruct((B, 1), jnp.float32),
        grid_spec=pltpu.PrefetchScalarGridSpec(
            num_scalar_prefetch=0,
            grid=grid,
            in_specs=in_specs,
            out_specs=out_specs,
            scratch_shapes=scratch_shapes,
        ),
        compiler_params=pltpu.CompilerParams(
            dimension_semantics=dim_sem,
            vmem_limit_bytes=vmem_limit,
        ),
        cost_estimate=cost,
    )(x, w1, b1, w2, b2, w3_row, b3_s)


# ---------------------------------------------------------------------------
# Parameter init (PyTorch-style) and plain-JAX reference
# ---------------------------------------------------------------------------
def init_params(key, input_size):
    """Uniform +/- 1/sqrt(fan_in) init.  Weights are (in_features, out_features)
    (transpose of nn.Linear.weight); biases are (1, out_features)."""
    def linear(key, fan_in, fan_out):
        kw, kb = jax.random.split(key)
        bound = 1.0 / jnp.sqrt(jnp.float32(fan_in))
        w = jax.random.uniform(kw, (fan_in, fan_out), jnp.float32, -bound, bound)
        b = jax.random.uniform(kb, (1, fan_out), jnp.float32, -bound, bound)
        return w, b

    k1, k2, k3 = jax.random.split(key, 3)
    w1, b1 = linear(k1, input_size, _H1)
    w2, b2 = linear(k2, _H1, _H2)
    w3, b3 = linear(k3, _H2, 1)
    return w1, b1, w2, b2, w3, b3


def reference_forward(x, w1, b1, w2, b2, w3, b3):
    """Plain-JAX reference matching the PyTorch forward semantics."""
    h1 = jnp.maximum(x @ w1 + b1, 0.0)
    h2 = jnp.maximum(h1 @ w2 + b2, 0.0)
    return jax.nn.sigmoid(h2 @ w3 + b3)


if __name__ == "__main__":
    key = jax.random.PRNGKey(0)
    k_x, k_p, k_x2, k_p2 = jax.random.split(key, 4)

    # Small shapes consistent with the module: batch=40, input_size=32.
    batch, input_size = 40, 32
    x = jax.random.normal(k_x, (batch, input_size), jnp.float32)
    params = init_params(k_p, input_size)
    ref = reference_forward(x, *params)

    # Default tile selection (batch < default tile -> single full-extent block).
    out = jax.block_until_ready(multilayer_nn_forward(x, *params))
    assert out.shape == (batch, 1), out.shape
    assert jnp.allclose(out, ref, atol=1e-5, rtol=1e-5), "mismatch vs reference"

    # Small explicit batch tile: exercises the multi-step pipelined batch grid
    # with a ragged (masked-writeback) tail.
    out_tiled = jax.block_until_ready(multilayer_nn_forward(x, *params, block_b=16))
    assert jnp.allclose(out_tiled, ref, atol=1e-5, rtol=1e-5), "tiled mismatch"

    # K-tiled path (used automatically when input_size > 2048), exercised here
    # at a small shape by forcing block_k=128 on input_size=256.
    batch2, input_size2 = 256, 256
    x2 = jax.random.normal(k_x2, (batch2, input_size2), jnp.float32)
    params2 = init_params(k_p2, input_size2)
    ref2 = reference_forward(x2, *params2)

    out_full = jax.block_until_ready(
        multilayer_nn_forward(x2, *params2, block_b=128))                 # nk == 1
    out_k = jax.block_until_ready(
        multilayer_nn_forward(x2, *params2, block_b=128, block_k=128))    # nk == 2
    assert out_k.shape == (batch2, 1), out_k.shape
    # K-split changes only the fc1 f32 accumulation order vs. the fused path.
    assert jnp.allclose(out_k, out_full, atol=1e-5, rtol=1e-5), "k-tiled mismatch"
    assert jnp.allclose(out_full, ref2, atol=2e-3, rtol=1e-3), "large-D mismatch"

    print("KERNEL_OK")
</pallas_src>

<mosaic_0001>
module attributes {stable_mosaic.version = 11 : i64} {
  func.func @_mlp_kernel(%arg0: i32, %arg1: memref<40x32xf32, #tpu.memory_space<vmem>>, %arg2: memref<32x128xf32, #tpu.memory_space<vmem>>, %arg3: memref<1x128xf32, #tpu.memory_space<vmem>>, %arg4: memref<128x64xf32, #tpu.memory_space<vmem>>, %arg5: memref<1x64xf32, #tpu.memory_space<vmem>>, %arg6: memref<1x64xf32, #tpu.memory_space<vmem>>, %arg7: memref<1xf32, #tpu.memory_space<smem>>, %arg8: memref<40x1xf32, #tpu.memory_space<vmem>>) attributes {dimension_semantics = [#tpu.dimension_semantics<parallel>], iteration_bounds = array<i64: 1>, scalar_prefetch = 0 : i64, scratch_operands = 0 : i64, tpu.core_type = #tpu.core_type<tc>, window_params = [{transform_indices = @transform_0, window_bounds = array<i64: 40, 32>}, {pipeline_mode = #tpu.pipeline_mode<synchronous>, transform_indices = @transform_1, window_bounds = array<i64: 32, 128>}, {pipeline_mode = #tpu.pipeline_mode<synchronous>, transform_indices = @transform_2, window_bounds = array<i64: 1, 128>}, {pipeline_mode = #tpu.pipeline_mode<synchronous>, transform_indices = @transform_3, window_bounds = array<i64: 128, 64>}, {pipeline_mode = #tpu.pipeline_mode<synchronous>, transform_indices = @transform_4, window_bounds = array<i64: 1, 64>}, {pipeline_mode = #tpu.pipeline_mode<synchronous>, transform_indices = @transform_5, window_bounds = array<i64: 1, 64>}, {transform_indices = @transform_6, window_bounds = array<i64: 1>}, {transform_indices = @transform_7, window_bounds = array<i64: 40, 1>}]} {
    %c0 = arith.constant 0 : index
    %c0_0 = arith.constant 0 : index
    %0 = vector.load %arg1[%c0, %c0_0] : memref<40x32xf32, #tpu.memory_space<vmem>>, vector<40x32xf32>
    %c0_1 = arith.constant 0 : index
    %c0_2 = arith.constant 0 : index
    %1 = vector.load %arg2[%c0_1, %c0_2] : memref<32x128xf32, #tpu.memory_space<vmem>>, vector<32x128xf32>
    %cst = arith.constant dense<0.000000e+00> : vector<40x128xf32>
    %2 = tpu.matmul %0, %1, %cst {dimension_numbers = #tpu.dot_dimension_numbers<[1], [0], [0], [1], [0, 0, 1, 1], [], []>} : vector<40x32xf32>, vector<32x128xf32>, vector<40x128xf32> -> vector<40x128xf32>
    %c0_3 = arith.constant 0 : index
    %c0_4 = arith.constant 0 : index
    %3 = vector.load %arg3[%c0_3, %c0_4] : memref<1x128xf32, #tpu.memory_space<vmem>>, vector<1x128xf32>
    %4 = vector.broadcast %3 : vector<1x128xf32> to vector<40x128xf32>
    %5 = arith.addf %2, %4 : vector<40x128xf32>
    %cst_5 = arith.constant 0.000000e+00 : f32
    %6 = vector.broadcast %cst_5 : f32 to vector<40x128xf32>
    %7 = arith.maximumf %5, %6 : vector<40x128xf32>
    %c0_6 = arith.constant 0 : index
    %c0_7 = arith.constant 0 : index
    %8 = vector.load %arg4[%c0_6, %c0_7] : memref<128x64xf32, #tpu.memory_space<vmem>>, vector<128x64xf32>
    %cst_8 = arith.constant dense<0.000000e+00> : vector<40x64xf32>
    %9 = tpu.matmul %7, %8, %cst_8 {dimension_numbers = #tpu.dot_dimension_numbers<[1], [0], [0], [1], [0, 0, 1, 1], [], []>} : vector<40x128xf32>, vector<128x64xf32>, vector<40x64xf32> -> vector<40x64xf32>
    %c0_9 = arith.constant 0 : index
    %c0_10 = arith.constant 0 : index
    %10 = vector.load %arg5[%c0_9, %c0_10] : memref<1x64xf32, #tpu.memory_space<vmem>>, vector<1x64xf32>
    %11 = vector.broadcast %10 : vector<1x64xf32> to vector<40x64xf32>
    %12 = arith.addf %9, %11 : vector<40x64xf32>
    %cst_11 = arith.constant 0.000000e+00 : f32
    %13 = vector.broadcast %cst_11 : f32 to vector<40x64xf32>
    %14 = arith.maximumf %12, %13 : vector<40x64xf32>
    %c0_12 = arith.constant 0 : index
    %c0_13 = arith.constant 0 : index
    %15 = vector.load %arg6[%c0_12, %c0_13] : memref<1x64xf32, #tpu.memory_space<vmem>>, vector<1x64xf32>
    %16 = vector.broadcast %15 : vector<1x64xf32> to vector<40x64xf32>
    %17 = arith.mulf %14, %16 : vector<40x64xf32>
    %cst_14 = arith.constant dense<0.000000e+00> : vector<40xf32>
    %18 = vector.multi_reduction <add>, %17, %cst_14 [1] : vector<40x64xf32> to vector<40xf32>
    %19 = vector.shape_cast %18 : vector<40xf32> to vector<40x1xf32>
    %c0_15 = arith.constant 0 : index
    %20 = memref.load %arg7[%c0_15] : memref<1xf32, #tpu.memory_space<smem>>
    %21 = vector.broadcast %20 : f32 to vector<40x1xf32>
    %22 = arith.addf %19, %21 : vector<40x1xf32>
    %23 = arith.negf %22 : vector<40x1xf32>
    %24 = math.exp %23 : vector<40x1xf32>
    %cst_16 = arith.constant 1.000000e+00 : f32
    %25 = vector.broadcast %cst_16 : f32 to vector<40x1xf32>
    %26 = arith.addf %25, %24 : vector<40x1xf32>
    %27 = arith.divf %25, %26 : vector<40x1xf32>
    %c0_17 = arith.constant 0 : index
    %c0_18 = arith.constant 0 : index
    %28 = vector.load %arg8[%c0_17, %c0_18] : memref<40x1xf32, #tpu.memory_space<vmem>>, vector<40x1xf32>
    tpu.vector_store %arg8[%c0_17, %c0_18], %27 {strides = array<i32>} : memref<40x1xf32, #tpu.memory_space<vmem>>, vector<40x1xf32>,
    return
  }
  func.func @transform_0(%arg0: i32) -> (i32, i32) {
    %c0_i32 = arith.constant 0 : i32
    %c0_i32_0 = arith.constant 0 : i32
    return %arg0, %c0_i32 : i32, i32
  }
  func.func @transform_1(%arg0: i32) -> (i32, i32) {
    %c0_i32 = arith.constant 0 : i32
    %c0_i32_0 = arith.constant 0 : i32
    %c0_i32_1 = arith.constant 0 : i32
    return %c0_i32, %c0_i32_0 : i32, i32
  }
  func.func @transform_2(%arg0: i32) -> (i32, i32) {
    %c0_i32 = arith.constant 0 : i32
    %c0_i32_0 = arith.constant 0 : i32
    %c0_i32_1 = arith.constant 0 : i32
    return %c0_i32, %c0_i32_0 : i32, i32
  }
  func.func @transform_3(%arg0: i32) -> (i32, i32) {
    %c0_i32 = arith.constant 0 : i32
    %c0_i32_0 = arith.constant 0 : i32
    %c0_i32_1 = arith.constant 0 : i32
    return %c0_i32, %c0_i32_0 : i32, i32
  }
  func.func @transform_4(%arg0: i32) -> (i32, i32) {
    %c0_i32 = arith.constant 0 : i32
    %c0_i32_0 = arith.constant 0 : i32
    %c0_i32_1 = arith.constant 0 : i32
    return %c0_i32, %c0_i32_0 : i32, i32
  }
  func.func @transform_5(%arg0: i32) -> (i32, i32) {
    %c0_i32 = arith.constant 0 : i32
    %c0_i32_0 = arith.constant 0 : i32
    %c0_i32_1 = arith.constant 0 : i32
    return %c0_i32, %c0_i32_0 : i32, i32
  }
  func.func @transform_6(%arg0: i32) -> i32 {
    %c0_i32 = arith.constant 0 : i32
    %c0_i32_0 = arith.constant 0 : i32
    return %c0_i32 : i32
  }
  func.func @transform_7(%arg0: i32) -> (i32, i32) {
    %c0_i32 = arith.constant 0 : i32
    %c0_i32_0 = arith.constant 0 : i32
    return %arg0, %c0_i32 : i32, i32
  }
}

</mosaic_0001>

<llo_original>
// kernel: multilayer_nn_forward.1
$region0: #{multilayer_nn_forward.1}
  #allocation0 [shape = 'u32[]', space=smem, size = 0x4, offset = 0x4, fixed_abs, tag = 'smem constant byte address 0x4 - core index']
  #allocation1 [shape = 'u32[144,128]{1,0:T(1,128)}', space=vmem, size = 0x12000, scoped, tag = 'internal scratch']
  #allocation2 [shape = 'f32[1]{0:T(128)S(6)}', space=smem, size = 0x200, scoped, tag = 'scoped memory for multilayer_nn_forward.1']
  %s0 = inlined_call_operand.vmem [shape: f32[40,32], index: 0, kind: input, shape index: {}]
  %s1 = inlined_call_operand.vmem [shape: f32[32,128], index: 1, kind: input, shape index: {}]
  %s2 = inlined_call_operand.vmem [shape: f32[1,128], index: 2, kind: input, shape index: {}]
  %s3 = inlined_call_operand.vmem [shape: f32[128,64], index: 3, kind: input, shape index: {}]
  %s4 = inlined_call_operand.vmem [shape: f32[1,64], index: 4, kind: input, shape index: {}]
  %s5 = inlined_call_operand.vmem [shape: f32[1,64], index: 5, kind: input, shape index: {}]
  %s6 = inlined_call_operand.<no memory space> [shape: f32[1], index: 6, kind: input, shape index: {}]
  %s7 = inlined_call_operand.vmem [shape: f32[40,1], index: 7, kind: output, shape index: {}]
  %s8 = sld [smem:[#allocation0]]
  $region38: #{multilayer_nn_forward.1} parent=0
    _
  %s10 = ssub.s32 1, %s8
  %s11 = scalar_select 0, %s10, %s8
  %12 = sst [smem:[#allocation2]] %s6
  // Predicated region
  $region2: #{multilayer_nn_forward.1} parent=0 // pred_check
    _
  $region3: #{multilayer_nn_forward.1} parent=0 // pred_check_branch
    %14 = sbr.rel (0) target = $region5
  $region4: #{multilayer_nn_forward.1} parent=0 // pred_region
    _
  $region5: #{multilayer_nn_forward.1} parent=0 // pred_fallthru
    _
  // Predicated region
  $region6: #{multilayer_nn_forward.1} parent=0 // pred_check
    _
  $region7: #{multilayer_nn_forward.1} parent=0 // pred_check_branch
    %16 = sbr.rel (0) target = $region9
  $region8: #{multilayer_nn_forward.1} parent=0 // pred_region
    _
  $region9: #{multilayer_nn_forward.1} parent=0 // pred_fallthru
    _
  // Predicated region
  $region10: #{multilayer_nn_forward.1} parent=0 // pred_check
    _
  $region11: #{multilayer_nn_forward.1} parent=0 // pred_check_branch
    %18 = sbr.rel (0) target = $region13
  $region12: #{multilayer_nn_forward.1} parent=0 // pred_region
    _
  $region13: #{multilayer_nn_forward.1} parent=0 // pred_fallthru
    _
  // Predicated region
  $region14: #{multilayer_nn_forward.1} parent=0 // pred_check
    _
  $region15: #{multilayer_nn_forward.1} parent=0 // pred_check_branch
    %20 = sbr.rel (0) target = $region17
  $region16: #{multilayer_nn_forward.1} parent=0 // pred_region
    _
  $region17: #{multilayer_nn_forward.1} parent=0 // pred_fallthru
    _
  // Predicated region
  $region18: #{multilayer_nn_forward.1} parent=0 // pred_check
    _
  $region19: #{multilayer_nn_forward.1} parent=0 // pred_check_branch
    %22 = sbr.rel (0) target = $region21
  $region20: #{multilayer_nn_forward.1} parent=0 // pred_region
    _
  $region21: #{multilayer_nn_forward.1} parent=0 // pred_fallthru
    _
  // Predicated region
  $region22: #{multilayer_nn_forward.1} parent=0 // pred_check
    _
  $region23: #{multilayer_nn_forward.1} parent=0 // pred_check_branch
    %24 = sbr.rel (0) target = $region25
  $region24: #{multilayer_nn_forward.1} parent=0 // pred_region
    _
  $region25: #{multilayer_nn_forward.1} parent=0 // pred_fallthru
    _
  // Predicated region
  $region26: #{multilayer_nn_forward.1} parent=0 // pred_check
    _
  $region27: #{multilayer_nn_forward.1} parent=0 // pred_check_branch
    %26 = sbr.rel (0) target = $region29
  $region28: #{multilayer_nn_forward.1} parent=0 // pred_region
    _
  $region29: #{multilayer_nn_forward.1} parent=0 // pred_fallthru
    _
  %v27 = vld [vmem:[%s0] sm:$0xff]
  %v28 = vld [vmem:[%s0 + $0x8] sm:$0xff]
  %v29 = vld [vmem:[%s0 + $0x10] sm:$0xff]
  %v30 = vld [vmem:[%s0 + $0x18] sm:$0xff]
  %v31 = vld [vmem:[%s0 + $0x20] sm:$0xff]
  %v32 = vld [vmem:[%s1] sm:$0xff]
  %v33 = vld [vmem:[%s1 + $0x8] sm:$0xff]
  %v34 = vld [vmem:[%s1 + $0x10] sm:$0xff]
  %v35 = vld [vmem:[%s1 + $0x18] sm:$0xff]
  %v36 = vld [vmem:[%s2] sm:$0x1]
  %v38 = vlaneseq
  %v39 = vshrl.u32 %v38, 7
  %v40 = vsub.s32 0, %v39
  %v41 = vrot.slane %v36, %v40
  %vm43 = vcmask 261120
  %v45 = vsel %vm43, %v27, 0
  %v48 = vsel %vm43, %v28, 0
  %v51 = vsel %vm43, %v29, 0
  %v54 = vsel %vm43, %v30, 0
  %v57 = vsel %vm43, %v31, 0
  %59 = vmatprep.subr.mxu0 0.0
  %60 = vmatpush1.msra.mxu0 0.0
  %61 = vmatprep.subr.mxu0 0.0
  %62 = vmatpush1.msra.mxu0 0.0
  %63 = vmatprep.subr.mxu0 0.0
  %64 = vmatpush1.msra.mxu0 0.0
  %65 = vmatprep.subr.mxu0 0.0
  %66 = vmatpush1.msra.mxu0 0.0
  %67 = vmatprep.subr.mxu0 0.0
  %68 = vmatpush1.msra.mxu0 0.0
  %69 = vmatprep.subr.mxu0 0.0
  %70 = vmatpush1.msra.mxu0 0.0
  %71 = vmatprep.subr.mxu0 0.0
  %72 = vmatpush1.msra.mxu0 0.0
  %73 = vmatprep.subr.mxu0 0.0
  %74 = vmatpush1.msra.mxu0 0.0
  %75 = vmatprep.subr.mxu0 0.0
  %76 = vmatpush1.msra.mxu0 0.0
  %77 = vmatprep.subr.mxu0 0.0
  %78 = vmatpush1.msra.mxu0 0.0
  %79 = vmatprep.subr.mxu0 0.0
  %80 = vmatpush1.msra.mxu0 0.0
  %81 = vmatprep.subr.mxu0 0.0
  %82 = vmatpush1.msra.mxu0 0.0
  %83 = vmatprep.subr.mxu0 0.0
  %84 = vmatpush1.msra.mxu0 %v35
  %85 = vmatprep.subr.mxu0 0.0
  %86 = vmatpush1.msra.mxu0 %v34
  %87 = vmatprep.subr.mxu0 0.0
  %88 = vmatpush1.msra.mxu0 %v33
  %89 = vmatprep.subr.mxu0 0.0
  %90 = vmatpush1.msra.mxu0 %v32
  %91 = vmatprep.subr.mxu0 0.0
  %92 = vmatpush2.msra.mxu0 0.0
  %93 = vmatprep.subr.mxu0 0.0
  %94 = vmatpush2.msra.mxu0 0.0
  %95 = vmatprep.subr.mxu0 0.0
  %96 = vmatpush2.msra.mxu0 0.0
  %97 = vmatprep.subr.mxu0 0.0
  %98 = vmatpush2.msra.mxu0 0.0
  %99 = vmatprep.subr.mxu0 0.0
  %100 = vmatpush2.msra.mxu0 0.0
  %101 = vmatprep.subr.mxu0 0.0
  %102 = vmatpush2.msra.mxu0 0.0
  %103 = vmatprep.subr.mxu0 0.0
  %104 = vmatpush2.msra.mxu0 0.0
  %105 = vmatprep.subr.mxu0 0.0
  %106 = vmatpush2.msra.mxu0 0.0
  %107 = vmatprep.subr.mxu0 0.0
  %108 = vmatpush2.msra.mxu0 0.0
  %109 = vmatprep.subr.mxu0 0.0
  %110 = vmatpush2.msra.mxu0 0.0
  %111 = vmatprep.subr.mxu0 0.0
  %112 = vmatpush2.msra.mxu0 0.0
  %113 = vmatprep.subr.mxu0 0.0
  %114 = vmatpush2.msra.mxu0 0.0
  %115 = vmatprep.subr.mxu0 0.0
  %116 = vmatpush2.msra.mxu0 0.0
  %117 = vmatprep.subr.mxu0 0.0
  %118 = vmatpush2.msra.mxu0 0.0
  %119 = vmatprep.subr.mxu0 0.0
  %120 = vmatpush2.msra.mxu0 0.0
  %121 = vmatprep.subr.mxu0 0.0
  %122 = vmatpush2.msra.mxu0 0.0
  %123 = vmatprep.mubr.f32.mxu0 0.0
  %124 = vmatmul.mubr.f32.gmra.mxu0 %v45
  %v125 = vpop.f32.mrf.mxu0
  %v126 = vadd.f32 %v41, %v125
  %v127 = vpop.f32.mrf.mxu0
  %128 = vmatprep.mubr.f32.mxu0 0.0
  %129 = vmatmul.mubr.f32.gmra.mxu0 %v48
  %v130 = vpop.f32.mrf.mxu0
  %v131 = vadd.f32 %v41, %v130
  %v132 = vpop.f32.mrf.mxu0
  %133 = vmatprep.mubr.f32.mxu0 0.0
  %134 = vmatmul.mubr.f32.gmra.mxu0 %v51
  %v135 = vpop.f32.mrf.mxu0
  %v136 = vadd.f32 %v41, %v135
  %v137 = vpop.f32.mrf.mxu0
  %138 = vmatprep.mubr.f32.mxu0 0.0
  %139 = vmatmul.mubr.f32.gmra.mxu0 %v54
  %v140 = vpop.f32.mrf.mxu0
  %v141 = vadd.f32 %v41, %v140
  %v142 = vpop.f32.mrf.mxu0
  %143 = vmatprep.mubr.f32.mxu0 0.0
  %144 = vmatmul.mubr.f32.gmra.mxu0 %v57
  %v145 = vpop.f32.mrf.mxu0
  %v146 = vadd.f32 %v41, %v145
  %v147 = vpop.f32.mrf.mxu0
  %148 = vdwg.mxu0
  %v149 = vmax.f32 %v126, 0.0
  %v150 = vmax.f32 %v131, 0.0
  %v151 = vmax.f32 %v136, 0.0
  %v152 = vmax.f32 %v141, 0.0
  %v153 = vmax.f32 %v146, 0.0
  %v154 = vld [vmem:[%s3] sm:$0xff]
  %v155 = vld [vmem:[%s3 + $0x8] sm:$0xff]
  %v156 = vld [vmem:[%s3 + $0x10] sm:$0xff]
  %v157 = vld [vmem:[%s3 + $0x18] sm:$0xff]
  %v158 = vld [vmem:[%s3 + $0x20] sm:$0xff]
  %v159 = vld [vmem:[%s3 + $0x28] sm:$0xff]
  %v160 = vld [vmem:[%s3 + $0x30] sm:$0xff]
  %v161 = vld [vmem:[%s3 + $0x38] sm:$0xff]
  %v162 = vld [vmem:[%s3 + $0x40] sm:$0xff]
  %v163 = vld [vmem:[%s3 + $0x48] sm:$0xff]
  %v164 = vld [vmem:[%s3 + $0x50] sm:$0xff]
  %v165 = vld [vmem:[%s3 + $0x58] sm:$0xff]
  %v166 = vld [vmem:[%s3 + $0x60] sm:$0xff]
  %v167 = vld [vmem:[%s3 + $0x68] sm:$0xff]
  %v168 = vld [vmem:[%s3 + $0x70] sm:$0xff]
  %v169 = vld [vmem:[%s3 + $0x78] sm:$0xff]
  %v170 = vld [vmem:[%s4] sm:$0x1]
  %v172 = vlaneseq
  %v173 = vshrl.u32 %v172, 7
  %v174 = vsub.s32 0, %v173
  %v175 = vrot.slane %v170, %v174
  %177 = vmatprep.subr.mxu0 0.0
  %178 = vmatpush1.msra.mxu0 %v169
  %179 = vmatprep.subr.mxu0 0.0
  %180 = vmatpush1.msra.mxu0 %v168
  %181 = vmatprep.subr.mxu0 0.0
  %182 = vmatpush1.msra.mxu0 %v167
  %183 = vmatprep.subr.mxu0 0.0
  %184 = vmatpush1.msra.mxu0 %v166
  %185 = vmatprep.subr.mxu0 0.0
  %186 = vmatpush1.msra.mxu0 %v165
  %187 = vmatprep.subr.mxu0 0.0
  %188 = vmatpush1.msra.mxu0 %v164
  %189 = vmatprep.subr.mxu0 0.0
  %190 = vmatpush1.msra.mxu0 %v163
  %191 = vmatprep.subr.mxu0 0.0
  %192 = vmatpush1.msra.mxu0 %v162
  %193 = vmatprep.subr.mxu0 0.0
  %194 = vmatpush1.msra.mxu0 %v161
  %195 = vmatprep.subr.mxu0 0.0
  %196 = vmatpush1.msra.mxu0 %v160
  %197 = vmatprep.subr.mxu0 0.0
  %198 = vmatpush1.msra.mxu0 %v159
  %199 = vmatprep.subr.mxu0 0.0
  %200 = vmatpush1.msra.mxu0 %v158
  %201 = vmatprep.subr.mxu0 0.0
  %202 = vmatpush1.msra.mxu0 %v157
  %203 = vmatprep.subr.mxu0 0.0
  %204 = vmatpush1.msra.mxu0 %v156
  %205 = vmatprep.subr.mxu0 0.0
  %206 = vmatpush1.msra.mxu0 %v155
  %207 = vmatprep.subr.mxu0 0.0
  %208 = vmatpush1.msra.mxu0 %v154
  %209 = vmatprep.subr.mxu0 0.0
  %210 = vmatpush2.msra.mxu0 0.0
  %211 = vmatprep.subr.mxu0 0.0
  %212 = vmatpush2.msra.mxu0 0.0
  %213 = vmatprep.subr.mxu0 0.0
  %214 = vmatpush2.msra.mxu0 0.0
  %215 = vmatprep.subr.mxu0 0.0
  %216 = vmatpush2.msra.mxu0 0.0
  %217 = vmatprep.subr.mxu0 0.0
  %218 = vmatpush2.msra.mxu0 0.0
  %219 = vmatprep.subr.mxu0 0.0
  %220 = vmatpush2.msra.mxu0 0.0
  %221 = vmatprep.subr.mxu0 0.0
  %222 = vmatpush2.msra.mxu0 0.0
  %223 = vmatprep.subr.mxu0 0.0
  %224 = vmatpush2.msra.mxu0 0.0
  %225 = vmatprep.subr.mxu0 0.0
  %226 = vmatpush2.msra.mxu0 0.0
  %227 = vmatprep.subr.mxu0 0.0
  %228 = vmatpush2.msra.mxu0 0.0
  %229 = vmatprep.subr.mxu0 0.0
  %230 = vmatpush2.msra.mxu0 0.0
  %231 = vmatprep.subr.mxu0 0.0
  %232 = vmatpush2.msra.mxu0 0.0
  %233 = vmatprep.subr.mxu0 0.0
  %234 = vmatpush2.msra.mxu0 0.0
  %235 = vmatprep.subr.mxu0 0.0
  %236 = vmatpush2.msra.mxu0 0.0
  %237 = vmatprep.subr.mxu0 0.0
  %238 = vmatpush2.msra.mxu0 0.0
  %239 = vmatprep.subr.mxu0 0.0
  %240 = vmatpush2.msra.mxu0 0.0
  %241 = vmatprep.mubr.f32.mxu0 0.0
  %242 = vmatmul.mubr.f32.gmra.mxu0 %v149
  %v243 = vpop.f32.mrf.mxu0
  %v244 = vadd.f32 %v175, %v243
  %v245 = vpop.f32.mrf.mxu0
  %246 = vmatprep.mubr.f32.mxu0 0.0
  %247 = vmatmul.mubr.f32.gmra.mxu0 %v150
  %v248 = vpop.f32.mrf.mxu0
  %v249 = vadd.f32 %v175, %v248
  %v250 = vpop.f32.mrf.mxu0
  %251 = vmatprep.mubr.f32.mxu0 0.0
  %252 = vmatmul.mubr.f32.gmra.mxu0 %v151
  %v253 = vpop.f32.mrf.mxu0
  %v254 = vadd.f32 %v175, %v253
  %v255 = vpop.f32.mrf.mxu0
  %256 = vmatprep.mubr.f32.mxu0 0.0
  %257 = vmatmul.mubr.f32.gmra.mxu0 %v152
  %v258 = vpop.f32.mrf.mxu0
  %v259 = vadd.f32 %v175, %v258
  %v260 = vpop.f32.mrf.mxu0
  %261 = vmatprep.mubr.f32.mxu0 0.0
  %262 = vmatmul.mubr.f32.gmra.mxu0 %v153
  %v263 = vpop.f32.mrf.mxu0
  %v264 = vadd.f32 %v175, %v263
  %v265 = vpop.f32.mrf.mxu0
  %266 = vdwg.mxu0
  %v267 = vmax.f32 %v244, 0.0
  %v268 = vmax.f32 %v249, 0.0
  %v269 = vmax.f32 %v254, 0.0
  %v270 = vmax.f32 %v259, 0.0
  %v271 = vmax.f32 %v264, 0.0
  %v272 = vld [vmem:[%s5] sm:$0x1]
  %v274 = vlaneseq
  %v275 = vshrl.u32 %v274, 7
  %v276 = vsub.s32 0, %v275
  %v277 = vrot.slane %v272, %v276
  %v279 = vmul.f32 %v267, %v277
  %v280 = vmul.f32 %v268, %v277
  %v281 = vmul.f32 %v269, %v277
  %v282 = vmul.f32 %v270, %v277
  %v283 = vmul.f32 %v271, %v277
  %vm284 = vcmask 523264
  %v285 = vsel %vm284, %v279, 0.0
  %286 = vadd.xlane.f32.xlu0 %v285
  %v287 = vpop.xlane.xlu0 %286
  %v288 = vsel %vm284, %v280, 0.0
  %289 = vadd.xlane.f32.xlu0 %v288
  %v290 = vpop.xlane.xlu0 %289
  %v291 = vsel %vm284, %v281, 0.0
  %292 = vadd.xlane.f32.xlu0 %v291
  %v293 = vpop.xlane.xlu0 %292
  %v294 = vsel %vm284, %v282, 0.0
  %295 = vadd.xlane.f32.xlu0 %v294
  %v296 = vpop.xlane.xlu0 %295
  %v297 = vsel %vm284, %v283, 0.0
  %298 = vadd.xlane.f32.xlu0 %v297
  %v299 = vpop.xlane.xlu0 %298
  %s300 = sld [smem:[#allocation2]]
  %v301 = vstv %s300
  %v302 = vadd.f32 %v287, %v301
  %v303 = vadd.f32 %v290, %v301
  %v304 = vadd.f32 %v293, %v301
  %v305 = vadd.f32 %v296, %v301
  %v306 = vadd.f32 %v299, %v301
  %v307 = vxor.u32 %v302, 2147483648
  %v308 = vxor.u32 %v303, 2147483648
  %v309 = vxor.u32 %v304, 2147483648
  %v310 = vxor.u32 %v305, 2147483648
  %v311 = vxor.u32 %v306, 2147483648
  %v312 = vmul.f32 %v307, 1.442695
  %v313 = vpow.pop %v312
  %v314 = vmul.f32 %v308, 1.442695
  %v315 = vpow.pop %v314
  %v316 = vmul.f32 %v309, 1.442695
  %v317 = vpow.pop %v316
  %v318 = vmul.f32 %v310, 1.442695
  %v319 = vpow.pop %v318
  %v320 = vmul.f32 %v311, 1.442695
  %v321 = vpow.pop %v320
  %v322 = vadd.f32 %v313, 1.0
  %v323 = vadd.f32 %v315, 1.0
  %v324 = vadd.f32 %v317, 1.0
  %v325 = vadd.f32 %v319, 1.0
  %v326 = vadd.f32 %v321, 1.0
  %v327 = vrcp.pop %v322
  %v328 = vmul.f32 1.0, %v327
  %v329 = vrcp.pop %v323
  %v330 = vmul.f32 1.0, %v329
  %v331 = vrcp.pop %v324
  %v332 = vmul.f32 1.0, %v331
  %v333 = vrcp.pop %v325
  %v334 = vmul.f32 1.0, %v333
  %v335 = vrcp.pop %v326
  %v336 = vmul.f32 1.0, %v335
  %vm337 = vcmask 7168
  %338 = vst.msk [vmem:[%s7] sm:$0xff] %vm337, %v328
  %339 = vst.msk [vmem:[%s7 + $0x8] sm:$0xff] %vm337, %v330
  %340 = vst.msk [vmem:[%s7 + $0x10] sm:$0xff] %vm337, %v332
  %341 = vst.msk [vmem:[%s7 + $0x18] sm:$0xff] %vm337, %v334
  %342 = vst.msk [vmem:[%s7 + $0x20] sm:$0xff] %vm337, %v336
  // Predicated region
  $region30: #{multilayer_nn_forward.1} parent=0 // pred_check
    _
  $region31: #{multilayer_nn_forward.1} parent=0 // pred_check_branch
    %344 = sbr.rel (0) target = $region33
  $region32: #{multilayer_nn_forward.1} parent=0 // pred_region
    _
  $region33: #{multilayer_nn_forward.1} parent=0 // pred_fallthru
    _
  // Predicated region
  $region34: #{multilayer_nn_forward.1} parent=0 // pred_check
    _
  $region35: #{multilayer_nn_forward.1} parent=0 // pred_check_branch
    %346 = sbr.rel (0) target = $region37
  $region36: #{multilayer_nn_forward.1} parent=0 // pred_region
    _
  $region37: #{multilayer_nn_forward.1} parent=0 // pred_fallthru
    _

</llo_original>
